<compile_context>
chip_gen: v7x
topology: tpu7x:2x2x1
jax: 0.10.0
libtpu: 0.0.40
codegen_flags: <defaults>
</compile_context>

<pallas_src>
import jax
import jax.numpy as jnp
from jax import lax
from jax.experimental import pallas as pl
from jax.experimental.pallas import tpu as pltpu

LANE = 128
SUBLANE = 8
NUM_CORES = 2          # v7x has 2 TensorCores; serial no-op on v5e/v6e
MAX_TILE_ROWS = 4096   # 4096 * 128 * 4 B = 2 MiB per f32 tile per input


def _round_down(x, m):
    return (x // m) * m


def _make_l1_kernel(tile_rows, tiles_per_core, valid_rows, need_mask):
    """Sum |p - t| into an (8, 128) per-core partial-sum output block."""

    def kernel(p_ref, t_ref, o_ref):
        i = pl.program_id(1)

        @pl.when(i == 0)
        def _():
            o_ref[...] = jnp.zeros_like(o_ref)

        d = jnp.abs(p_ref[...].astype(jnp.float32) -
                    t_ref[...].astype(jnp.float32))

        if need_mask:
            c = pl.program_id(0)
            row0 = (c * tiles_per_core + i) * tile_rows
            ridx = row0 + lax.broadcasted_iota(jnp.int32, (tile_rows, LANE), 0)
            # Rows past the end of the slab (or a fully-duplicated clamped
            # tile) contribute exactly zero; jnp.where (a select) also
            # neutralises any NaN/Inf garbage in the padded part of the block.
            d = jnp.where(ridx < valid_rows, d, 0.0)

        # Fold sublane-groups with pure VPU adds; no cross-lane (XLU)
        # reduction and no masked scalar store in the steady-state loop.
        o_ref[...] += d.reshape(tile_rows // SUBLANE, SUBLANE, LANE).sum(axis=0)

    return kernel


def depth_loss(y_pred, y_true):
    """Mean absolute error, matching torch.nn.L1Loss() (default 'mean')."""
    assert y_pred.shape == y_true.shape, (y_pred.shape, y_true.shape)
    n = y_pred.size
    p = y_pred.reshape(-1)
    t = y_true.reshape(-1)

    itemsize = jnp.dtype(p.dtype).itemsize
    # Minimum sublane multiple for the dtype's packed vreg layout.
    min_sub = {4: SUBLANE, 2: 2 * SUBLANE, 1: 4 * SUBLANE}.get(itemsize, SUBLANE)

    rows = n // LANE
    main = rows * LANE  # elements covered by complete 128-lane rows

    # Too small for even one (min_sub, 128) block: just do it in the wrapper.
    if rows < min_sub:
        diff = p.astype(jnp.float32) - t.astype(jnp.float32)
        return jnp.sum(jnp.abs(diff)) / jnp.float32(n)

    if main != n:
        # Sub-row tail (< 128 elements): tiny, sum with plain jnp instead of
        # materialising padded copies of both inputs.
        tail_sum = jnp.sum(jnp.abs(p[main:].astype(jnp.float32) -
                                   t[main:].astype(jnp.float32)))
        # TODO(synk): this prefix slice costs one extra HBM pass when numel is
        # not a multiple of 128; typical image tensors take the copy-free path.
        p2 = p[:main].reshape(rows, LANE)
        t2 = t[:main].reshape(rows, LANE)
    else:
        tail_sum = jnp.float32(0.0)
        p2 = p.reshape(rows, LANE)   # contiguous reshape: no copy
        t2 = t.reshape(rows, LANE)

    # Tile selection: as large as possible (roofline), capped so the
    # double-buffered footprint (2 inputs x 2 bufs x 2 MiB = 8 MiB) fits every
    # generation's scoped VMEM, and small enough that both cores get work on
    # modest inputs.  Always a multiple of min_sub and never larger than rows.
    tile_rows = min(MAX_TILE_ROWS,
                    max(min_sub, _round_down(rows // NUM_CORES, min_sub)))
    tiles_total = pl.cdiv(rows, tile_rows)
    tiles_per_core = pl.cdiv(tiles_total, NUM_CORES)
    need_mask = (NUM_CORES * tiles_per_core * tile_rows) != rows

    def in_map(c, i):
        # Clamp so a core whose range runs past the last tile re-reads a valid
        # tile; its contribution is masked to zero inside the kernel.
        return (jnp.minimum(c * tiles_per_core + i, tiles_total - 1), 0)

    kernel = _make_l1_kernel(tile_rows, tiles_per_core, rows, need_mask)

    partials = pl.pallas_call(
        kernel,
        out_shape=jax.ShapeDtypeStruct((NUM_CORES * SUBLANE, LANE), jnp.float32),
        grid_spec=pltpu.PrefetchScalarGridSpec(
            num_scalar_prefetch=0,
            grid=(NUM_CORES, tiles_per_core),
            in_specs=[
                pl.BlockSpec((tile_rows, LANE), in_map),
                pl.BlockSpec((tile_rows, LANE), in_map),
            ],
            out_specs=pl.BlockSpec((SUBLANE, LANE), lambda c, i: (c, 0)),
        ),
        compiler_params=pltpu.CompilerParams(
            dimension_semantics=("parallel", "arbitrary"),
            vmem_limit_bytes=32 * 1024 * 1024,
        ),
        cost_estimate=pl.CostEstimate(
            flops=3 * main,
            transcendentals=0,
            bytes_accessed=2 * main * itemsize + NUM_CORES * SUBLANE * LANE * 4,
        ),
    )(p2, t2)

    total = jnp.sum(partials) + tail_sum
    return total / jnp.float32(n)


if __name__ == "__main__":
    key = jax.random.PRNGKey(0)
    k1, k2 = jax.random.split(key)

    # NCHW depth-map-like inputs.
    y_pred = jax.random.normal(k1, (2, 4, 16, 16), dtype=jnp.float32)
    y_true = jax.random.normal(k2, (2, 4, 16, 16), dtype=jnp.float32)

    loss = jax.block_until_ready(jax.jit(depth_loss)(y_pred, y_true))
    ref = jnp.mean(jnp.abs(y_pred - y_true))
    assert jnp.allclose(loss, ref, rtol=1e-5, atol=1e-5), (loss, ref)

    # Ragged shape: exercises the masked last tile and the <128-element tail.
    k3, k4 = jax.random.split(k2)
    a = jax.random.normal(k3, (2, 3, 15, 17), dtype=jnp.float32)
    b = jax.random.normal(k4, (2, 3, 15, 17), dtype=jnp.float32)
    loss2 = jax.block_until_ready(jax.jit(depth_loss)(a, b))
    ref2 = jnp.mean(jnp.abs(a - b))
    assert jnp.allclose(loss2, ref2, rtol=1e-5, atol=1e-5), (loss2, ref2)

    print("KERNEL_OK")
</pallas_src>

<mosaic_0001>
module attributes {stable_mosaic.version = 11 : i64} {
  func.func @kernel(%arg0: i32, %arg1: i32, %arg2: memref<8x128xf32, #tpu.memory_space<vmem>>, %arg3: memref<8x128xf32, #tpu.memory_space<vmem>>, %arg4: memref<8x128xf32, #tpu.memory_space<vmem>>) attributes {dimension_semantics = [#tpu.dimension_semantics<parallel>, #tpu.dimension_semantics<arbitrary>], iteration_bounds = array<i64: 2, 1>, scalar_prefetch = 0 : i64, scratch_operands = 0 : i64, tpu.core_type = #tpu.core_type<tc>, window_params = [{transform_indices = @transform_0, window_bounds = array<i64: 8, 128>}, {transform_indices = @transform_1, window_bounds = array<i64: 8, 128>}, {transform_indices = @transform_2, window_bounds = array<i64: 8, 128>}]} {
    %c0_i32 = arith.constant 0 : i32
    %0 = arith.cmpi eq, %arg1, %c0_i32 : i32
    %1 = arith.extui %0 : i1 to i32
    %c0_i32_0 = arith.constant 0 : i32
    %2 = arith.cmpi ne, %1, %c0_i32_0 : i32
    scf.if %2 {
      %cst_8 = arith.constant 0.000000e+00 : f32
      %12 = vector.broadcast %cst_8 : f32 to vector<8x128xf32>
      %c0_9 = arith.constant 0 : index
      %c0_10 = arith.constant 0 : index
      %13 = vector.load %arg4[%c0_9, %c0_10] : memref<8x128xf32, #tpu.memory_space<vmem>>, vector<8x128xf32>
      tpu.vector_store %arg4[%c0_9, %c0_10], %12 {strides = array<i32>} : memref<8x128xf32, #tpu.memory_space<vmem>>, vector<8x128xf32>,
    } else {
    }
    %c0 = arith.constant 0 : index
    %c0_1 = arith.constant 0 : index
    %3 = vector.load %arg2[%c0, %c0_1] : memref<8x128xf32, #tpu.memory_space<vmem>>, vector<8x128xf32>
    %c0_2 = arith.constant 0 : index
    %c0_3 = arith.constant 0 : index
    %4 = vector.load %arg3[%c0_2, %c0_3] : memref<8x128xf32, #tpu.memory_space<vmem>>, vector<8x128xf32>
    %5 = arith.subf %3, %4 : vector<8x128xf32>
    %6 = math.absf %5 : vector<8x128xf32>
    %c0_4 = arith.constant 0 : index
    %c0_5 = arith.constant 0 : index
    %7 = vector.load %arg4[%c0_4, %c0_5] : memref<8x128xf32, #tpu.memory_space<vmem>>, vector<8x128xf32>
    %8 = vector.shape_cast %6 : vector<8x128xf32> to vector<1x8x128xf32>
    %cst = arith.constant dense<0.000000e+00> : vector<8x128xf32>
    %9 = vector.multi_reduction <add>, %8, %cst [0] : vector<1x8x128xf32> to vector<8x128xf32>
    %10 = arith.addf %7, %9 : vector<8x128xf32>
    %c0_6 = arith.constant 0 : index
    %c0_7 = arith.constant 0 : index
    %11 = vector.load %arg4[%c0_6, %c0_7] : memref<8x128xf32, #tpu.memory_space<vmem>>, vector<8x128xf32>
    tpu.vector_store %arg4[%c0_6, %c0_7], %10 {strides = array<i32>} : memref<8x128xf32, #tpu.memory_space<vmem>>, vector<8x128xf32>,
    return
  }
  func.func @transform_0(%arg0: i32, %arg1: i32) -> (i32, i32) {
    %c1_i32 = arith.constant 1 : i32
    %0 = arith.muli %arg0, %c1_i32 : i32
    %1 = arith.addi %0, %arg1 : i32
    %c1_i32_0 = arith.constant 1 : i32
    %2 = arith.minsi %1, %c1_i32_0 : i32
    %c0_i32 = arith.constant 0 : i32
    %c0_i32_1 = arith.constant 0 : i32
    return %2, %c0_i32 : i32, i32
  }
  func.func @transform_1(%arg0: i32, %arg1: i32) -> (i32, i32) {
    %c1_i32 = arith.constant 1 : i32
    %0 = arith.muli %arg0, %c1_i32 : i32
    %1 = arith.addi %0, %arg1 : i32
    %c1_i32_0 = arith.constant 1 : i32
    %2 = arith.minsi %1, %c1_i32_0 : i32
    %c0_i32 = arith.constant 0 : i32
    %c0_i32_1 = arith.constant 0 : i32
    return %2, %c0_i32 : i32, i32
  }
  func.func @transform_2(%arg0: i32, %arg1: i32) -> (i32, i32) {
    %c0_i32 = arith.constant 0 : i32
    %c0_i32_0 = arith.constant 0 : i32
    return %arg0, %c0_i32 : i32, i32
  }
}

</mosaic_0001>

<llo_original>
// kernel: depth_loss.1
$region0: #{depth_loss.1}
  #allocation0 [shape = 'u32[]', space=smem, size = 0x4, offset = 0x4, fixed_abs, tag = 'smem constant byte address 0x4 - core index']
  #allocation1 [shape = 'u32[144,128]{1,0:T(1,128)}', space=vmem, size = 0x12000, scoped, tag = 'internal scratch']
  %s0 = inlined_call_operand.vmem [shape: f32[16,128], index: 0, kind: input, shape index: {}]
  %s1 = inlined_call_operand.vmem [shape: f32[16,128], index: 1, kind: input, shape index: {}]
  %s2 = inlined_call_operand.vmem [shape: f32[16,128], index: 2, kind: output, shape index: {}]
  %s3 = sld [smem:[#allocation0]]
  $region45: #{depth_loss.1} parent=0
    _
  %s5 = ssub.s32 1, %s3
  %s6 = scalar_select 0, %s5, %s3
  loop: start=0, step=1, limit=4
  $region2: #{depth_loss.1} parent=0 // loop_pre_header
    _
  $region3: #{depth_loss.1} parent=0 // loop_header
    %s8 = sphi 0, %s12
    %p9 = scmp.ge.s32.totalorder %s8, 4
    %s15 = sphi 0, %s27
    %s16 = sphi 0, %s23
    %s17 = sphi 0, %s15
    %s18 = sphi 0, %s16
    %s19 = sphi 0, %s17
    %s20 = sphi 0, %s18
    %s36 = sphi 0, %s38
    %s39 = sphi 0, %s36
    %s40 = sphi 0, %s39
    %s56 = sphi 0, %s40
    %s68 = sphi 0, %s70
    %s71 = sphi 0, %s68
    %s72 = sphi 0, %s71
    %s88 = sphi 0, %s72
    %s94 = sphi 0, %s96
    %s97 = sphi 0, %s94
    %s98 = sphi 0, %s97
    %s114 = sphi 0, %s98
  $region4: #{depth_loss.1} parent=0 // loop_header_branch
    %11 = sbr.rel (%p9) target = $region8
  $region5: #{depth_loss.1} parent=0 // loop_body
    %s13 = ssub.s32 %s8, 1
    %s14 = ssub.s32 %s8, 2
    %s21 = sadd.s32 1, %s16
    %p22 = scmp.ge.s32.totalorder %s21, 1
    %s23 = scalar_select %p22, 0, %s21
    %s24 = sadd.s32 1, %s15
    %s25 = scalar_select %p22, %s24, %s15
    %p26 = scmp.ge.s32.totalorder %s25, 2
    %s27 = scalar_select %p26, 0, %s25
    %s28 = sadd.s32 %s15, %s16
    %p29 = scmp.lt.s32.totalorder %s28, 1
    %s30 = scalar_select %p29, %s28, 1
    %s31 = sadd.s32 %s27, %s23
    %p32 = scmp.lt.s32.totalorder %s31, 1
    %s33 = scalar_select %p32, %s31, 1
    %s34 = ssub.s32 %s30, %s33
    %p35 = scmp.eq.s32.totalorder %s34, 0
    %s37 = sadd.s32 %s36, 1
    %s38 = scalar_select %p35, %s36, %s37
    %p41 = pneg %p35
    %p42 = scmp.eq.s32.totalorder %s8, 1
    %p43 = por %p41, %p42
    %p44 = scmp.ne.s32.totalorder %s36, %s39
    %p45 = scmp.eq.s32.totalorder %s8, 0
    %p46 = por %p44, %p45
    %p47 = scmp.ne.s32.totalorder %s36, %s39
    %p48 = scmp.eq.s32.totalorder %s13, 1
    %p49 = por %p47, %p48
    %p50 = scmp.ne.s32.totalorder %s39, %s40
    %p51 = scmp.eq.s32.totalorder %s13, 0
    %p52 = por %p50, %p51
    %p53 = scmp.ne.s32.totalorder %s39, %s40
    %p54 = scmp.eq.s32.totalorder %s14, 1
    %p55 = por %p53, %p54
    %p57 = scmp.ne.s32.totalorder %s40, %s56
    %p58 = scmp.eq.s32.totalorder %s14, 0
    %p59 = por %p57, %p58
    %s60 = sadd.s32 %s15, %s16
    %p61 = scmp.lt.s32.totalorder %s60, 1
    %s62 = scalar_select %p61, %s60, 1
    %s63 = sadd.s32 %s27, %s23
    %p64 = scmp.lt.s32.totalorder %s63, 1
    %s65 = scalar_select %p64, %s63, 1
    %s66 = ssub.s32 %s62, %s65
    %p67 = scmp.eq.s32.totalorder %s66, 0
    %s69 = sadd.s32 %s68, 1
    %s70 = scalar_select %p67, %s68, %s69
    %p73 = pneg %p67
    %p74 = scmp.eq.s32.totalorder %s8, 1
    %p75 = por %p73, %p74
    %p76 = scmp.ne.s32.totalorder %s68, %s71
    %p77 = scmp.eq.s32.totalorder %s8, 0
    %p78 = por %p76, %p77
    %p79 = scmp.ne.s32.totalorder %s68, %s71
    %p80 = scmp.eq.s32.totalorder %s13, 1
    %p81 = por %p79, %p80
    %p82 = scmp.ne.s32.totalorder %s71, %s72
    %p83 = scmp.eq.s32.totalorder %s13, 0
    %p84 = por %p82, %p83
    %p85 = scmp.ne.s32.totalorder %s71, %s72
    %p86 = scmp.eq.s32.totalorder %s14, 1
    %p87 = por %p85, %p86
    %p89 = scmp.ne.s32.totalorder %s72, %s88
    %p90 = scmp.eq.s32.totalorder %s14, 0
    %p91 = por %p89, %p90
    %s92 = ssub.s32 %s15, %s27
    %p93 = scmp.eq.s32.totalorder %s92, 0
    %s95 = sadd.s32 %s94, 1
    %s96 = scalar_select %p93, %s94, %s95
    %p99 = pneg %p93
    %p100 = scmp.eq.s32.totalorder %s8, 1
    %p101 = por %p99, %p100
    %p102 = scmp.ne.s32.totalorder %s94, %s97
    %p103 = scmp.eq.s32.totalorder %s8, 0
    %p104 = por %p102, %p103
    %p105 = scmp.ne.s32.totalorder %s94, %s97
    %p106 = scmp.eq.s32.totalorder %s13, 1
    %p107 = por %p105, %p106
    %p108 = scmp.ne.s32.totalorder %s97, %s98
    %p109 = scmp.eq.s32.totalorder %s13, 0
    %p110 = por %p108, %p109
    %p111 = scmp.ne.s32.totalorder %s97, %s98
    %p112 = scmp.eq.s32.totalorder %s14, 1
    %p113 = por %p111, %p112
    %p115 = scmp.ne.s32.totalorder %s98, %s114
    %p116 = scmp.eq.s32.totalorder %s14, 0
    %p117 = por %p115, %p116
    %p118 = scmp.le.s32.totalorder 1, %s8
    %p119 = scmp.lt.s32.totalorder %s8, 3
    %p120 = pnand %p118, %p119
    %p121 = pneg %p120
    // Predicated region
    $region9: #{depth_loss.1} parent=5 // pred_check
      _
    $region10: #{depth_loss.1} parent=5 // pred_check_branch
      %123 = sbr.rel (%p120) target = $region12
    $region11: #{depth_loss.1} parent=5 // pred_region
      %s124 = ssub.s32 %s8, 1
    $region12: #{depth_loss.1} parent=5 // pred_fallthru
      _
    %p125 = scmp.lt.s32.totalorder %s8, 2
    // Predicated region
    $region13: #{depth_loss.1} parent=5 // pred_check
      %p126 = pneg %p125
    $region14: #{depth_loss.1} parent=5 // pred_check_branch
      %128 = sbr.rel (%p126) target = $region16
    $region15: #{depth_loss.1} parent=5 // pred_region
      // Predicated region
      $region17: #{depth_loss.1} parent=15 // pred_check
        %p129 = pneg %p46
      $region18: #{depth_loss.1} parent=15 // pred_check_branch
        %131 = sbr.rel (%p129) target = $region20
      $region19: #{depth_loss.1} parent=15 // pred_region
        %s132 = sadd.s32 %s15, %s16
        %p133 = scmp.lt.s32.totalorder %s132, 1
        %s134 = scalar_select %p133, %s132, 1
        %p135 = scmp.lt.s32.totalorder %s134, 1
        %s136 = scalar_select %p135, %s134, 1
        %s137 = smul.addr %s136, 8
        %s138 = scalar_lea.vmem %s0, %s137
        %s139 = sadd.s32 %s15, %s16
        %p140 = scmp.lt.s32.totalorder %s139, 1
        %s141 = scalar_select %p140, %s139, 1
      $region20: #{depth_loss.1} parent=15 // pred_fallthru
        _
      // Predicated region
      $region21: #{depth_loss.1} parent=15 // pred_check
        %p142 = pneg %p78
      $region22: #{depth_loss.1} parent=15 // pred_check_branch
        %144 = sbr.rel (%p142) target = $region24
      $region23: #{depth_loss.1} parent=15 // pred_region
        %s145 = sadd.s32 %s15, %s16
        %p146 = scmp.lt.s32.totalorder %s145, 1
        %s147 = scalar_select %p146, %s145, 1
        %p148 = scmp.lt.s32.totalorder %s147, 1
        %s149 = scalar_select %p148, %s147, 1
        %s150 = smul.addr %s149, 8
        %s151 = scalar_lea.vmem %s1, %s150
        %s152 = sadd.s32 %s15, %s16
        %p153 = scmp.lt.s32.totalorder %s152, 1
        %s154 = scalar_select %p153, %s152, 1
      $region24: #{depth_loss.1} parent=15 // pred_fallthru
        _
    $region16: #{depth_loss.1} parent=5 // pred_fallthru
      _
    %p155 = scmp.le.s32.totalorder 1, %s8
    %p156 = scmp.lt.s32.totalorder %s8, 3
    %p157 = pnand %p155, %p156
    %p158 = pneg %p157
    // Predicated region
    $region25: #{depth_loss.1} parent=5 // pred_check
      _
    $region26: #{depth_loss.1} parent=5 // pred_check_branch
      %160 = sbr.rel (%p157) target = $region28
    $region27: #{depth_loss.1} parent=5 // pred_region
      %s161 = ssub.s32 %s8, 1
      %s162 = sadd.s32 %s17, %s18
      %p163 = scmp.lt.s32.totalorder %s162, 1
      %s164 = scalar_select %p163, %s162, 1
      %p165 = scmp.lt.s32.totalorder %s164, 1
      %s166 = scalar_select %p165, %s164, 1
      %s167 = smul.addr %s166, 8
      %s168 = scalar_lea.vmem %s0, %s167
      %p169 = pneg %p52
      %p170 = pneg %p49
      %s171 = sadd.s32 %s17, %s18
      %p172 = scmp.lt.s32.totalorder %s171, 1
      %s173 = scalar_select %p172, %s171, 1
      %p174 = scmp.lt.s32.totalorder %s173, 1
      %s175 = scalar_select %p174, %s173, 1
      %s176 = smul.addr %s175, 8
      %s177 = scalar_lea.vmem %s1, %s176
      %p178 = pneg %p84
      %p179 = pneg %p81
      %p180 = pneg %p110
      %p181 = pneg %p107
      %p182 = scmp.lt.s32.totalorder %s17, 1
      %s183 = scalar_select %p182, %s17, 1
      %s184 = smul.addr %s183, 8
      %s185 = scalar_lea.vmem %s2, %s184
      %s186 = sadd.s32 %s17, %s18
      %p187 = scmp.lt.s32.totalorder %s186, 1
      %s188 = scalar_select %p187, %s186, 1
      %p189 = scmp.lt.s32.totalorder %s188, 1
      %s190 = scalar_select %p189, %s188, 1
      %s191 = smul.addr %s190, 8
      %s192 = scalar_lea.vmem %s0, %s191
      %s193 = sadd.s32 %s17, %s18
      %p194 = scmp.lt.s32.totalorder %s193, 1
      %s195 = scalar_select %p194, %s193, 1
      %s196 = sadd.s32 %s17, %s18
      %p197 = scmp.lt.s32.totalorder %s196, 1
      %s198 = scalar_select %p197, %s196, 1
      %p199 = scmp.lt.s32.totalorder %s198, 1
      %s200 = scalar_select %p199, %s198, 1
      %s201 = smul.addr %s200, 8
      %s202 = scalar_lea.vmem %s1, %s201
      %s203 = sadd.s32 %s17, %s18
      %p204 = scmp.lt.s32.totalorder %s203, 1
      %s205 = scalar_select %p204, %s203, 1
      %p206 = scmp.lt.s32.totalorder %s17, 1
      %s207 = scalar_select %p206, %s17, 1
      %s208 = smul.addr %s207, 8
      %s209 = scalar_lea.vmem %s2, %s208
      %p210 = scmp.eq.s32.totalorder %s18, 0
      // Predicated region
      $region29: #{depth_loss.1} parent=27 // pred_check
        %p211 = pneg %p210
      $region30: #{depth_loss.1} parent=27 // pred_check_branch
        %213 = sbr.rel (%p211) target = $region32
      $region31: #{depth_loss.1} parent=27 // pred_region
        %214 = vst [vmem:[%s209] sm:$0xff] 0.0
      $region32: #{depth_loss.1} parent=27 // pred_fallthru
        _
      %v215 = vld [vmem:[%s192] sm:$0xff]
      %v216 = vld [vmem:[%s202] sm:$0xff]
      %v217 = vsub.f32 %v215, %v216
      %v218 = vand.u32 2147483647, %v217
      %v219 = vld [vmem:[%s209] sm:$0xff]
      %v220 = vadd.f32 %v218, 0.0
      %v221 = vadd.f32 %v219, %v220
      %222 = vst [vmem:[%s209] sm:$0xff] %v221
      %p223 = scmp.lt.s32.totalorder %s17, 1
      %s224 = scalar_select %p223, %s17, 1
      %s225 = smul.addr %s224, 8
      %s226 = scalar_lea.vmem %s2, %s225
      // Predicated region
      $region33: #{depth_loss.1} parent=27 // pred_check
        %p227 = pneg %p107
      $region34: #{depth_loss.1} parent=27 // pred_check_branch
        %229 = sbr.rel (%p227) target = $region36
      $region35: #{depth_loss.1} parent=27 // pred_region
        _
      $region36: #{depth_loss.1} parent=27 // pred_fallthru
        _
    $region28: #{depth_loss.1} parent=5 // pred_fallthru
      _
    %p230 = scmp.le.s32.totalorder 2, %s8
    // Predicated region
    $region37: #{depth_loss.1} parent=5 // pred_check
      %p231 = pneg %p230
    $region38: #{depth_loss.1} parent=5 // pred_check_branch
      %233 = sbr.rel (%p231) target = $region40
    $region39: #{depth_loss.1} parent=5 // pred_region
      %s234 = ssub.s32 %s8, 2
      // Predicated region
      $region41: #{depth_loss.1} parent=39 // pred_check
        %p235 = pneg %p113
      $region42: #{depth_loss.1} parent=39 // pred_check_branch
        %237 = sbr.rel (%p235) target = $region44
      $region43: #{depth_loss.1} parent=39 // pred_region
        %p238 = scmp.lt.s32.totalorder %s19, 1
        %s239 = scalar_select %p238, %s19, 1
        %s240 = smul.addr %s239, 8
        %s241 = scalar_lea.vmem %s2, %s240
      $region44: #{depth_loss.1} parent=39 // pred_fallthru
        _
    $region40: #{depth_loss.1} parent=5 // pred_fallthru
      _
  $region6: #{depth_loss.1} parent=0 // loop_footer
    %s12 = sadd.s32 1, %s8
  $region7: #{depth_loss.1} parent=0 // loop_footer_branch
    %7 = sbr.rel target = $region3
  $region8: #{depth_loss.1} parent=0 // loop_exit
    _

</llo_original>
